<compile_context>
chip_gen: v5e
topology: v5e:2x2
jax: 0.10.0
libtpu: 0.0.40
codegen_flags: <defaults>
</compile_context>

<pallas_src>
import jax
import jax.numpy as jnp
from jax.experimental import pallas as pl
from jax.experimental.pallas import tpu as pltpu

IN_FEATURES = 2
OUT_FEATURES = 1


def _linear_sigmoid_kernel(w_ref, b_ref, x_ref, o_ref):
    # w_ref: SMEM f32[2], b_ref: SMEM f32[1]
    # x_ref: VMEM f32[IN, tile_b] (batch on lanes), o_ref: VMEM f32[1, tile_b]
    w0 = w_ref[0]
    w1 = w_ref[1]
    b0 = b_ref[0]

    x0 = x_ref[0:1, :]                      # [1, tile_b]
    x1 = x_ref[1:2, :]                      # [1, tile_b]

    # Pure VPU: 2 muls + 2 adds per 128 batch elements; sigmoid's exp/recip
    # issue on the EUP slot. No MXU involvement at all.
    z = x0 * w0 + x1 * w1 + b0              # [1, tile_b], f32
    o_ref[...] = jax.nn.sigmoid(z).astype(o_ref.dtype)


def _round_up(n, m):
    return ((n + m - 1) // m) * m


def naive_bayes_forward(x, w, b, *, max_tile_b=512):
    """x: [B, 2] f32, w: [1, 2] f32 (PyTorch nn.Linear layout), b: [1] f32.

    Returns sigmoid(x @ w.T + b) with shape [B, 1].
    """
    B = x.shape[0]

    # Feature-major layout: batch on the lane axis.
    xt = jnp.transpose(x).astype(jnp.float32)          # [IN, B]

    # Lane-dense tile: multiple of 128, capped so double-buffered tiles stay
    # tiny relative to scoped VMEM on all of v5e/v6e/v7x.
    tile_b = min(max_tile_b, _round_up(B, 128))
    pad_b = _round_up(B, tile_b)
    if pad_b != B:
        xt = jnp.pad(xt, ((0, 0), (0, pad_b - B)))

    w_flat = jnp.reshape(w, (IN_FEATURES,)).astype(jnp.float32)   # [2]
    b_flat = jnp.reshape(b, (OUT_FEATURES,)).astype(jnp.float32)  # [1]

    out = pl.pallas_call(
        _linear_sigmoid_kernel,
        out_shape=jax.ShapeDtypeStruct((OUT_FEATURES, pad_b), jnp.float32),
        grid=(pad_b // tile_b,),
        in_specs=[
            # Tiny parameters: scalar memory, read once via the scalar path.
            pl.BlockSpec(memory_space=pltpu.MemorySpace.SMEM),
            pl.BlockSpec(memory_space=pltpu.MemorySpace.SMEM),
            # Lane-dense activation tiles (first dim == full array dim).
            pl.BlockSpec((IN_FEATURES, tile_b), lambda i: (0, i)),
        ],
        out_specs=pl.BlockSpec((OUT_FEATURES, tile_b), lambda i: (0, i)),
        compiler_params=pltpu.CompilerParams(
            dimension_semantics=("parallel",),
        ),
    )(w_flat, b_flat, xt)

    # Back to the PyTorch-facing [B, 1] layout (drops batch padding).
    return out[0, :B].reshape(B, OUT_FEATURES)


if __name__ == "__main__":
    key = jax.random.PRNGKey(0)
    kx, kw, kb = jax.random.split(key, 3)

    B = 8  # small batch consistent with Linear(2, 1)

    # nn.Linear(2, 1) init: uniform(-1/sqrt(in_features), 1/sqrt(in_features))
    bound = 1.0 / (IN_FEATURES ** 0.5)
    w = jax.random.uniform(kw, (OUT_FEATURES, IN_FEATURES), jnp.float32,
                           minval=-bound, maxval=bound)   # PyTorch stores [out, in]
    b = jax.random.uniform(kb, (OUT_FEATURES,), jnp.float32,
                           minval=-bound, maxval=bound)

    x = jax.random.normal(kx, (B, IN_FEATURES), jnp.float32)

    out = naive_bayes_forward(x, w, b)
    out = jax.block_until_ready(out)

    # Reference in plain JAX (same formulation -> tight tolerance is safe).
    ref = jax.nn.sigmoid(x @ w.T + b)
    assert out.shape == (B, OUT_FEATURES)
    assert jnp.allclose(out, ref, atol=1e-6), "mismatch vs reference"

    print("KERNEL_OK")
</pallas_src>

<mosaic_0001>
module attributes {stable_mosaic.version = 11 : i64} {
  func.func @_linear_sigmoid_kernel(%arg0: i32, %arg1: memref<2xf32, #tpu.memory_space<smem>>, %arg2: memref<1xf32, #tpu.memory_space<smem>>, %arg3: memref<2x128xf32, #tpu.memory_space<vmem>>, %arg4: memref<1x128xf32, #tpu.memory_space<vmem>>) attributes {dimension_semantics = [#tpu.dimension_semantics<parallel>], iteration_bounds = array<i64: 1>, scalar_prefetch = 0 : i64, scratch_operands = 0 : i64, tpu.core_type = #tpu.core_type<tc>, window_params = [{transform_indices = @transform_0, window_bounds = array<i64: 2>}, {transform_indices = @transform_1, window_bounds = array<i64: 1>}, {transform_indices = @transform_2, window_bounds = array<i64: 2, 128>}, {transform_indices = @transform_3, window_bounds = array<i64: 1, 128>}]} {
    %c0 = arith.constant 0 : index
    %0 = memref.load %arg1[%c0] : memref<2xf32, #tpu.memory_space<smem>>
    %c1 = arith.constant 1 : index
    %1 = memref.load %arg1[%c1] : memref<2xf32, #tpu.memory_space<smem>>
    %c0_0 = arith.constant 0 : index
    %2 = memref.load %arg2[%c0_0] : memref<1xf32, #tpu.memory_space<smem>>
    %c0_1 = arith.constant 0 : index
    %c0_2 = arith.constant 0 : index
    %3 = vector.load %arg3[%c0_1, %c0_2] : memref<2x128xf32, #tpu.memory_space<vmem>>, vector<1x128xf32>
    %c1_3 = arith.constant 1 : index
    %c0_4 = arith.constant 0 : index
    %4 = vector.load %arg3[%c1_3, %c0_4] : memref<2x128xf32, #tpu.memory_space<vmem>>, vector<1x128xf32>
    %5 = vector.broadcast %0 : f32 to vector<1x128xf32>
    %6 = arith.mulf %3, %5 : vector<1x128xf32>
    %7 = vector.broadcast %1 : f32 to vector<1x128xf32>
    %8 = arith.mulf %4, %7 : vector<1x128xf32>
    %9 = arith.addf %6, %8 : vector<1x128xf32>
    %10 = vector.broadcast %2 : f32 to vector<1x128xf32>
    %11 = arith.addf %9, %10 : vector<1x128xf32>
    %12 = arith.negf %11 : vector<1x128xf32>
    %13 = math.exp %12 : vector<1x128xf32>
    %cst = arith.constant 1.000000e+00 : f32
    %14 = vector.broadcast %cst : f32 to vector<1x128xf32>
    %15 = arith.addf %14, %13 : vector<1x128xf32>
    %16 = arith.divf %14, %15 : vector<1x128xf32>
    %c0_5 = arith.constant 0 : index
    %c0_6 = arith.constant 0 : index
    %17 = vector.load %arg4[%c0_5, %c0_6] : memref<1x128xf32, #tpu.memory_space<vmem>>, vector<1x128xf32>
    tpu.vector_store %arg4[%c0_5, %c0_6], %16 {strides = array<i32>} : memref<1x128xf32, #tpu.memory_space<vmem>>, vector<1x128xf32>,
    return
  }
  func.func @transform_0(%arg0: i32) -> i32 {
    %c0_i32 = arith.constant 0 : i32
    %c0_i32_0 = arith.constant 0 : i32
    return %c0_i32 : i32
  }
  func.func @transform_1(%arg0: i32) -> i32 {
    %c0_i32 = arith.constant 0 : i32
    %c0_i32_0 = arith.constant 0 : i32
    return %c0_i32 : i32
  }
  func.func @transform_2(%arg0: i32) -> (i32, i32) {
    %c0_i32 = arith.constant 0 : i32
    %c0_i32_0 = arith.constant 0 : i32
    return %c0_i32, %arg0 : i32, i32
  }
  func.func @transform_3(%arg0: i32) -> (i32, i32) {
    %c0_i32 = arith.constant 0 : i32
    %c0_i32_0 = arith.constant 0 : i32
    return %c0_i32, %arg0 : i32, i32
  }
}

</mosaic_0001>

<llo_original>
// kernel: tpu_custom_call.1
$region0: #{tpu_custom_call.1}
  #allocation0 [shape = 'u32[]', space=smem, size = 0x4, offset = 0x4, fixed_abs, tag = 'smem constant byte address 0x4 - core index']
  #allocation1 [shape = 'u32[72,128]{1,0:T(1,128)}', space=vmem, size = 0x9000, scoped, tag = 'internal scratch']
  #allocation2 [shape = 'f32[1]{0:T(128)S(6)}', space=smem, size = 0x200, scoped, tag = 'scoped memory for tpu_custom_call.1']
  %s0 = inlined_call_operand.hbm [shape: f32[2], index: 0, kind: input, shape index: {}]
  %s1 = inlined_call_operand.<no memory space> [shape: f32[1], index: 1, kind: input, shape index: {}]
  %s2 = inlined_call_operand.vmem [shape: f32[2,128], index: 2, kind: input, shape index: {}]
  %s3 = inlined_call_operand.hbm [shape: f32[1,128], index: 3, kind: output, shape index: {}]
  %s4 = sld [smem:[#allocation0]]
  $region26: #{tpu_custom_call.1} parent=0
    _
  %s6 = ssub.s32 1, %s4
  %s7 = scalar_select 0, %s6, %s4
  %8 = sst [smem:[#allocation2]] %s1
  $region1: #{tpu_custom_call.1} parent=0
    #allocation3 [shape = 'u8[512]{0}', space=smem, size = 0x200, scoped, tag = 'input window, operand 0, single buffered']
    #allocation4 [shape = 's32[1]{0}', space=sflag, size = 0x4, scoped, tag = 'scoped memory for tpu_custom_call.1']
    #allocation5 [shape = 's32[1]{0}', space=sflag, size = 0x4, scoped, tag = 'scoped memory for tpu_custom_call.1']
    #allocation6 [shape = 'u8[512]{0}', space=vmem, size = 0x400, scoped, tag = 'output window, operand 0, single buffered']
    %9 = vsyncpa [#allocation5], 0
    %10 = vsyncpa [#allocation4], 0
    // Predicated region
    $region2: #{tpu_custom_call.1} parent=1 // pred_check
      _
    $region3: #{tpu_custom_call.1} parent=1 // pred_check_branch
      %12 = sbr.rel (0) target = $region5
    $region4: #{tpu_custom_call.1} parent=1 // pred_region
      %14 = vsyncadd [#allocation5], 0
      %s16 = sshll.u32 %s0, 4
      %s17 = int_to_ptr.hbm [resolvable:$true] %s16
      %19 = dma.hbm_to_smem %s17, 16, [#allocation3], [#allocation5]
    $region5: #{tpu_custom_call.1} parent=1 // pred_fallthru
      _
    // Predicated region
    $region6: #{tpu_custom_call.1} parent=1 // pred_check
      _
    $region7: #{tpu_custom_call.1} parent=1 // pred_check_branch
      %21 = sbr.rel (0) target = $region9
    $region8: #{tpu_custom_call.1} parent=1 // pred_region
      _
    $region9: #{tpu_custom_call.1} parent=1 // pred_fallthru
      _
    // Predicated region
    $region10: #{tpu_custom_call.1} parent=1 // pred_check
      _
    $region11: #{tpu_custom_call.1} parent=1 // pred_check_branch
      %23 = sbr.rel (0) target = $region13
    $region12: #{tpu_custom_call.1} parent=1 // pred_region
      _
    $region13: #{tpu_custom_call.1} parent=1 // pred_fallthru
      _
    // Predicated region
    $region14: #{tpu_custom_call.1} parent=1 // pred_check
      _
    $region15: #{tpu_custom_call.1} parent=1 // pred_check_branch
      %25 = sbr.rel (0) target = $region17
    $region16: #{tpu_custom_call.1} parent=1 // pred_region
      %27 = dma.done [#allocation5], 16
    $region17: #{tpu_custom_call.1} parent=1 // pred_fallthru
      _
    %28 = sfence
    %s29 = sld [smem:[#allocation3]]
    %s30 = sld [smem:[#allocation3 + $0x1]]
    %s31 = sld [smem:[#allocation2]]
    %v32 = vld [vmem:[%s2] sm:$0x1]
    %v33 = vld [vmem:[%s2 + $0x1] sm:$0x1]
    %v34 = vstv %s29
    %v35 = vmul.f32 %v32, %v34
    %v36 = vstv %s30
    %v37 = vmul.f32 %v33, %v36
    %v38 = vadd.f32 %v35, %v37
    %v39 = vstv %s31
    %v40 = vadd.f32 %v38, %v39
    %v41 = vxor.u32 %v40, 2147483648
    %v42 = vmul.f32 %v41, 1.442695
    %v43 = vpow.pop %v42
    %v44 = vadd.f32 %v43, 1.0
    %v45 = vrcp.pop %v44
    %v46 = vmul.f32 %v44, %v45
    %v47 = vsub.f32 1.0, %v46
    %v48 = vmul.f32 %v45, %v47
    %v49 = vadd.f32 %v45, %v48
    %vm50 = vweird.f32 %v44
    %vm51 = vweird.f32 %v45
    %vm52 = vmor %vm50, %vm51
    %v53 = vsel %vm52, %v45, %v49
    %v54 = vand.u32 2147483647, %v44
    %vm55 = vcmp.eq.f32.partialorder %v54, 8.507059e+37
    %v56 = vand.u32 %v44, 2147483648
    %v57 = vor.u32 1.1754944e-38, %v56
    %v58 = vsel %vm55, %v57, %v53
    %v59 = vmul.f32 1.0, %v58
    %60 = vst [vmem:[#allocation6] sm:$0x1] %v59
    // Predicated region
    $region18: #{tpu_custom_call.1} parent=1 // pred_check
      _
    $region19: #{tpu_custom_call.1} parent=1 // pred_check_branch
      %62 = sbr.rel (0) target = $region21
    $region20: #{tpu_custom_call.1} parent=1 // pred_region
      %64 = vsyncadd [#allocation4], 0
      %s66 = sshll.u32 [#allocation6], 4
      %s67 = int_to_ptr.vmem [resolvable:$true] %s66
      %s68 = sshll.u32 %s3, 4
      %s69 = int_to_ptr.hbm [resolvable:$true] %s68
      %71 = dma.vmem_to_hbm [thread:$0]  %s67, 16, %s69, [#allocation4]
    $region21: #{tpu_custom_call.1} parent=1 // pred_fallthru
      _
    // Predicated region
    $region22: #{tpu_custom_call.1} parent=1 // pred_check
      _
    $region23: #{tpu_custom_call.1} parent=1 // pred_check_branch
      %73 = sbr.rel (0) target = $region25
    $region24: #{tpu_custom_call.1} parent=1 // pred_region
      %75 = dma.done [#allocation4], 16
    $region25: #{tpu_custom_call.1} parent=1 // pred_fallthru
      _
    %76 = vsyncpa [#allocation4], 1
    %77 = vsyncpa [#allocation5], 1

</llo_original>
